<compile_context>
chip_gen: v7x
topology: tpu7x:2x2x1
jax: 0.10.0
libtpu: 0.0.40
codegen_flags: <defaults>
</compile_context>

<pallas_src>
import jax
import jax.numpy as jnp
from jax.experimental import pallas as pl
from jax.experimental.pallas import tpu as pltpu

CHAR_EMBED = 50   # char_embed_size (fixed by the module)
KERNEL = 5        # CNN kernel_size (fixed by the module)
LANE = 128


def _round_up(x, m):
    return (x + m - 1) // m * m


def _char_cnn_kernel(ids_ref, tk_ref, convb_ref, hww_ref, hwb_ref, out_ref):
    tile_n, M = ids_ref.shape
    K, V_pad, E_pad = tk_ref.shape
    T = M - K + 1                                  # valid conv output length

    ids = ids_ref[...]                             # (tile_n, M) int32

    # --- One-hot of all M char positions, stacked along sublanes -----------------
    # Row block m holds char position m for every word in the tile.  f32 select +
    # bf16 downcast (v5e has no bf16 VALU); the axis=0 concat is pure sublane
    # placement (tile_n % 8 == 0), no cross-lane movement.
    iota_v = jax.lax.broadcasted_iota(jnp.int32, (tile_n, V_pad), 1)
    onehot = jnp.concatenate(
        [jnp.where(iota_v == ids[:, m:m + 1], 1.0, 0.0).astype(jnp.bfloat16)
         for m in range(M)],
        axis=0)                                    # (M*tile_n, V_pad) bf16

    # --- Embedding gather + Conv1d fused: K accumulated MXU dots ------------------
    # conv[t-block] = sum_k onehot[(t+k)-block] @ (table @ W[:, :, k]^T)
    conv = jnp.dot(onehot[0:T * tile_n, :], tk_ref[0],
                   preferred_element_type=jnp.float32)
    for k in range(1, K):
        conv = conv + jnp.dot(onehot[k * tile_n:(k + T) * tile_n, :], tk_ref[k],
                              preferred_element_type=jnp.float32)
    conv = jnp.maximum(conv + convb_ref[...], 0.0)            # (T*tile_n, E_pad) f32

    # --- Max over time: log2(T) pairwise tree (all in VMEM) ----------------------
    parts = [conv[t * tile_n:(t + 1) * tile_n, :] for t in range(T)]
    while len(parts) > 1:
        nxt = [jnp.maximum(parts[i], parts[i + 1]) for i in range(0, len(parts) - 1, 2)]
        if len(parts) % 2:
            nxt.append(parts[-1])
        parts = nxt
    x_word = parts[0]                                          # (tile_n, E_pad) f32

    # --- Highway: fused [W_proj | W_gate] -> single (tile_n,E) x (E,2E) dot -------
    h = jnp.dot(x_word.astype(jnp.bfloat16), hww_ref[...],
                preferred_element_type=jnp.float32) + hwb_ref[...]
    x_proj = jnp.maximum(h[:, :E_pad], 0.0)
    x_gate = 1.0 / (1.0 + jnp.exp(-h[:, E_pad:]))              # exact sigmoid (EUP exp)
    out = x_gate * x_proj + (1.0 - x_gate) * x_word

    # TODO(synk): training-mode Dropout(0.3) (pltpu.prng_seed + prng_random_bits mask)
    # is not implemented; eval-mode identity matches PyTorch .eval().
    out_ref[...] = out.astype(out_ref.dtype)


def _prepare_params(params):
    """Fuse/pad the PyTorch-layout weights for the kernel (also used by the mirror ref)."""
    table = params["char_table"].astype(jnp.float32)           # (V, C)
    conv_w = params["conv_w"].astype(jnp.float32)              # (E, C, K) torch Conv1d
    conv_b = params["conv_b"].astype(jnp.float32)              # (E,)
    w_proj = params["w_proj"].astype(jnp.float32)              # (E, E) torch (out, in)
    b_proj = params["b_proj"].astype(jnp.float32)
    w_gate = params["w_gate"].astype(jnp.float32)
    b_gate = params["b_gate"].astype(jnp.float32)
    V, C = table.shape
    E, C2, K = conv_w.shape
    assert C2 == C and K == KERNEL
    E_pad = _round_up(E, LANE)
    V_pad = _round_up(V, LANE)
    hi = jax.lax.Precision.HIGHEST

    # Fold the embedding table into the conv weights: Tk[k] = table @ W[:, :, k]^T.
    tk = jnp.einsum("vc,eck->kve", table, conv_w, precision=hi)          # f32
    tk = jnp.pad(tk, ((0, 0), (0, V_pad - V), (0, E_pad - E))).astype(jnp.bfloat16)
    b_conv = jnp.pad(conv_b, (0, E_pad - E)).reshape(1, E_pad)

    # Highway: x @ W.T with [proj | gate] fused into one (E_pad, 2*E_pad) matrix.
    wp = jnp.pad(w_proj.T, ((0, E_pad - E), (0, E_pad - E)))
    wg = jnp.pad(w_gate.T, ((0, E_pad - E), (0, E_pad - E)))
    w_hw = jnp.concatenate([wp, wg], axis=1).astype(jnp.bfloat16)
    b_hw = jnp.concatenate([jnp.pad(b_proj, (0, E_pad - E)),
                            jnp.pad(b_gate, (0, E_pad - E))]).reshape(1, 2 * E_pad)
    return dict(tk=tk, b_conv=b_conv, w_hw=w_hw, b_hw=b_hw,
                K=K, E=E, E_pad=E_pad, V_pad=V_pad)


def model_embeddings_forward(chars, params, *, tile_n=None, out_dtype=jnp.float32):
    """chars: (L, B, M) int char ids.  Returns (L, B, E) word embeddings."""
    L, B, M = chars.shape
    N = L * B
    prep = _prepare_params(params)
    K, E, E_pad, V_pad = prep["K"], prep["E"], prep["E_pad"], prep["V_pad"]

    # Tile over words.  512 words/step amortizes per-step overhead while keeping
    # intermediates ~4 MB/tile, safe on v7x's 64 MiB VMEM (v5e/v6e could go larger).
    if tile_n is None:
        tile_n = min(512, _round_up(N, 8))
    tile_n = max(8, _round_up(tile_n, 8))
    N_pad = _round_up(N, tile_n)

    ids = chars.reshape(N, M).astype(jnp.int32)
    ids = jnp.pad(ids, ((0, N_pad - N), (0, 0)))               # pad words with char id 0

    out = pl.pallas_call(
        _char_cnn_kernel,
        out_shape=jax.ShapeDtypeStruct((N_pad, E_pad), out_dtype),
        grid_spec=pltpu.PrefetchScalarGridSpec(
            num_scalar_prefetch=0,
            grid=(N_pad // tile_n,),
            in_specs=[
                pl.BlockSpec((tile_n, M), lambda i: (i, 0)),            # char ids (only per-word HBM input)
                pl.BlockSpec((K, V_pad, E_pad), lambda i: (0, 0, 0)),   # fused table@conv weights
                pl.BlockSpec((1, E_pad), lambda i: (0, 0)),             # conv bias
                pl.BlockSpec((E_pad, 2 * E_pad), lambda i: (0, 0)),     # [W_proj | W_gate]
                pl.BlockSpec((1, 2 * E_pad), lambda i: (0, 0)),         # [b_proj | b_gate]
            ],
            out_specs=pl.BlockSpec((tile_n, E_pad), lambda i: (i, 0)),
        ),
        compiler_params=pltpu.CompilerParams(
            dimension_semantics=("parallel",),
            vmem_limit_bytes=48 * 1024 * 1024,    # headroom on v7x (64 MiB physical)
        ),
    )(ids, prep["tk"], prep["b_conv"], prep["w_hw"], prep["b_hw"])

    return out[:N, :E].reshape(L, B, E)


def fused_reference_forward(chars, params):
    """Pure-JAX mirror of the EXACT arithmetic the kernel performs (fused bf16 conv
    weights, bf16 MXU inputs, f32 accumulation).  Used for the tight check."""
    prep = _prepare_params(params)
    K, E, E_pad = prep["K"], prep["E"], prep["E_pad"]
    L, B, M = chars.shape
    N = L * B
    T = M - K + 1
    hi = jax.lax.Precision.HIGHEST

    tk = prep["tk"].astype(jnp.float32)                        # (K, V_pad, E_pad)
    ids = chars.reshape(N, M)
    conv = tk[0][ids[:, 0:T]]                                  # (N, T, E_pad)
    for k in range(1, K):
        conv = conv + tk[k][ids[:, k:k + T]]
    conv = jnp.maximum(conv + prep["b_conv"].reshape(1, 1, -1), 0.0)
    x_word = jnp.max(conv, axis=1)                             # (N, E_pad)

    xb = x_word.astype(jnp.bfloat16).astype(jnp.float32)
    h = jnp.einsum("ne,ef->nf", xb, prep["w_hw"].astype(jnp.float32),
                   precision=hi) + prep["b_hw"].reshape(1, -1)
    x_proj = jnp.maximum(h[:, :E_pad], 0.0)
    gate = 1.0 / (1.0 + jnp.exp(-h[:, E_pad:]))
    out = gate * x_proj + (1.0 - gate) * x_word
    return out[:, :E].reshape(L, B, E)


def reference_forward(chars, params):
    """PyTorch-faithful f32 math: gather -> conv -> relu -> max -> highway -> sigmoid."""
    K = KERNEL
    L, B, M = chars.shape
    N = L * B
    T = M - K + 1
    hi = jax.lax.Precision.HIGHEST
    table = params["char_table"].astype(jnp.float32)
    conv_w = params["conv_w"].astype(jnp.float32)
    conv_b = params["conv_b"].astype(jnp.float32)
    w_proj = params["w_proj"].astype(jnp.float32)
    b_proj = params["b_proj"].astype(jnp.float32)
    w_gate = params["w_gate"].astype(jnp.float32)
    b_gate = params["b_gate"].astype(jnp.float32)
    E = conv_w.shape[0]

    x = table[chars.reshape(N, M)]                             # (N, M, C)
    conv = jnp.zeros((N, T, E), jnp.float32) + conv_b[None, None, :]
    for k in range(K):
        conv = conv + jnp.einsum("ntc,ec->nte", x[:, k:k + T, :], conv_w[:, :, k],
                                 precision=hi)
    conv = jnp.maximum(conv, 0.0)
    x_word = jnp.max(conv, axis=1)                             # (N, E)

    proj = jnp.maximum(jnp.einsum("ne,fe->nf", x_word, w_proj, precision=hi) + b_proj, 0.0)
    gate = 1.0 / (1.0 + jnp.exp(-(jnp.einsum("ne,fe->nf", x_word, w_gate, precision=hi) + b_gate)))
    out = gate * proj + (1.0 - gate) * x_word
    return out.reshape(L, B, E)


if __name__ == "__main__":
    key = jax.random.PRNGKey(0)
    L, B, M = 4, 2, 12          # sentence_length, batch_size, max_word_length
    V_char = 64                 # character vocab size
    E = 32                      # word embed_size
    C = CHAR_EMBED

    ks = jax.random.split(key, 8)
    chars = jax.random.randint(ks[0], (L, B, M), 0, V_char, dtype=jnp.int32)

    table = jax.random.normal(ks[1], (V_char, C), jnp.float32)
    table = table.at[0].set(0.0)  # nn.Embedding padding_idx=0
    params = {
        "char_table": table.astype(jnp.bfloat16),
        "conv_w": (0.1 * jax.random.normal(ks[2], (E, C, KERNEL), jnp.float32)).astype(jnp.bfloat16),
        "conv_b": 0.1 * jax.random.normal(ks[3], (E,), jnp.float32),
        "w_proj": (0.1 * jax.random.normal(ks[4], (E, E), jnp.float32)).astype(jnp.bfloat16),
        "b_proj": 0.1 * jax.random.normal(ks[5], (E,), jnp.float32),
        "w_gate": (0.1 * jax.random.normal(ks[6], (E, E), jnp.float32)).astype(jnp.bfloat16),
        "b_gate": 0.1 * jax.random.normal(ks[7], (E,), jnp.float32),
    }

    out = jax.block_until_ready(model_embeddings_forward(chars, params))
    assert out.shape == (L, B, E), out.shape

    # Tight check: mirrors the kernel's fused-bf16 arithmetic exactly.
    mirror = jax.block_until_ready(fused_reference_forward(chars, params))
    err_mirror = float(jnp.max(jnp.abs(out - mirror)))
    if err_mirror > 2e-3:
        raise AssertionError("mismatch vs fused mirror: max abs err %g" % err_mirror)

    # Semantic check: PyTorch-faithful f32 math.  Error budget: K=5 bf16 roundings
    # of the fused conv weights (~1e-2 worst case on these activation scales) plus
    # the bf16 cast of the highway MXU input.
    ref = jax.block_until_ready(reference_forward(chars, params))
    err = float(jnp.max(jnp.abs(out - ref)))
    if err > 3e-2:
        raise AssertionError("mismatch vs f32 reference: max abs err %g" % err)

    print("KERNEL_OK")
</pallas_src>

<mosaic_0001>
module attributes {stable_mosaic.version = 11 : i64} {
  func.func @_char_cnn_kernel(%arg0: i32, %arg1: memref<8x12xi32, #tpu.memory_space<vmem>>, %arg2: memref<5x128x128xbf16, #tpu.memory_space<vmem>>, %arg3: memref<1x128xf32, #tpu.memory_space<vmem>>, %arg4: memref<128x256xbf16, #tpu.memory_space<vmem>>, %arg5: memref<1x256xf32, #tpu.memory_space<vmem>>, %arg6: memref<8x128xf32, #tpu.memory_space<vmem>>) attributes {dimension_semantics = [#tpu.dimension_semantics<parallel>], iteration_bounds = array<i64: 1>, scalar_prefetch = 0 : i64, scratch_operands = 0 : i64, tpu.core_type = #tpu.core_type<tc>, window_params = [{transform_indices = @transform_0, window_bounds = array<i64: 8, 12>}, {pipeline_mode = #tpu.pipeline_mode<synchronous>, transform_indices = @transform_1, window_bounds = array<i64: 5, 128, 128>}, {pipeline_mode = #tpu.pipeline_mode<synchronous>, transform_indices = @transform_2, window_bounds = array<i64: 1, 128>}, {pipeline_mode = #tpu.pipeline_mode<synchronous>, transform_indices = @transform_3, window_bounds = array<i64: 128, 256>}, {pipeline_mode = #tpu.pipeline_mode<synchronous>, transform_indices = @transform_4, window_bounds = array<i64: 1, 256>}, {transform_indices = @transform_5, window_bounds = array<i64: 8, 128>}]} {
    %c0 = arith.constant 0 : index
    %c0_0 = arith.constant 0 : index
    %0 = vector.load %arg1[%c0, %c0_0] : memref<8x12xi32, #tpu.memory_space<vmem>>, vector<8x12xi32>
    %1 = tpu.iota {dimensions = array<i32: 1>} : vector<8x128xi32>
    %2 = vector.extract_strided_slice %0 {offsets = [0, 0], sizes = [8, 1], strides = [1, 1]} : vector<8x12xi32> to vector<8x1xi32>
    %3 = vector.broadcast %2 : vector<8x1xi32> to vector<8x128xi32>
    %4 = arith.cmpi eq, %1, %3 : vector<8x128xi32>
    %cst = arith.constant 1.000000e+00 : f32
    %cst_1 = arith.constant 0.000000e+00 : f32
    %5 = vector.broadcast %cst : f32 to vector<8x128xf32>
    %6 = vector.broadcast %cst_1 : f32 to vector<8x128xf32>
    %7 = arith.select %4, %5, %6 : vector<8x128xi1>, vector<8x128xf32>
    %8 = arith.truncf %7 : vector<8x128xf32> to vector<8x128xbf16>
    %9 = vector.extract_strided_slice %0 {offsets = [0, 1], sizes = [8, 1], strides = [1, 1]} : vector<8x12xi32> to vector<8x1xi32>
    %10 = vector.broadcast %9 : vector<8x1xi32> to vector<8x128xi32>
    %11 = arith.cmpi eq, %1, %10 : vector<8x128xi32>
    %cst_2 = arith.constant 1.000000e+00 : f32
    %cst_3 = arith.constant 0.000000e+00 : f32
    %12 = vector.broadcast %cst_2 : f32 to vector<8x128xf32>
    %13 = vector.broadcast %cst_3 : f32 to vector<8x128xf32>
    %14 = arith.select %11, %12, %13 : vector<8x128xi1>, vector<8x128xf32>
    %15 = arith.truncf %14 : vector<8x128xf32> to vector<8x128xbf16>
    %16 = vector.extract_strided_slice %0 {offsets = [0, 2], sizes = [8, 1], strides = [1, 1]} : vector<8x12xi32> to vector<8x1xi32>
    %17 = vector.broadcast %16 : vector<8x1xi32> to vector<8x128xi32>
    %18 = arith.cmpi eq, %1, %17 : vector<8x128xi32>
    %cst_4 = arith.constant 1.000000e+00 : f32
    %cst_5 = arith.constant 0.000000e+00 : f32
    %19 = vector.broadcast %cst_4 : f32 to vector<8x128xf32>
    %20 = vector.broadcast %cst_5 : f32 to vector<8x128xf32>
    %21 = arith.select %18, %19, %20 : vector<8x128xi1>, vector<8x128xf32>
    %22 = arith.truncf %21 : vector<8x128xf32> to vector<8x128xbf16>
    %23 = vector.extract_strided_slice %0 {offsets = [0, 3], sizes = [8, 1], strides = [1, 1]} : vector<8x12xi32> to vector<8x1xi32>
    %24 = vector.broadcast %23 : vector<8x1xi32> to vector<8x128xi32>
    %25 = arith.cmpi eq, %1, %24 : vector<8x128xi32>
    %cst_6 = arith.constant 1.000000e+00 : f32
    %cst_7 = arith.constant 0.000000e+00 : f32
    %26 = vector.broadcast %cst_6 : f32 to vector<8x128xf32>
    %27 = vector.broadcast %cst_7 : f32 to vector<8x128xf32>
    %28 = arith.select %25, %26, %27 : vector<8x128xi1>, vector<8x128xf32>
    %29 = arith.truncf %28 : vector<8x128xf32> to vector<8x128xbf16>
    %30 = vector.extract_strided_slice %0 {offsets = [0, 4], sizes = [8, 1], strides = [1, 1]} : vector<8x12xi32> to vector<8x1xi32>
    %31 = vector.broadcast %30 : vector<8x1xi32> to vector<8x128xi32>
    %32 = arith.cmpi eq, %1, %31 : vector<8x128xi32>
    %cst_8 = arith.constant 1.000000e+00 : f32
    %cst_9 = arith.constant 0.000000e+00 : f32
    %33 = vector.broadcast %cst_8 : f32 to vector<8x128xf32>
    %34 = vector.broadcast %cst_9 : f32 to vector<8x128xf32>
    %35 = arith.select %32, %33, %34 : vector<8x128xi1>, vector<8x128xf32>
    %36 = arith.truncf %35 : vector<8x128xf32> to vector<8x128xbf16>
    %37 = vector.extract_strided_slice %0 {offsets = [0, 5], sizes = [8, 1], strides = [1, 1]} : vector<8x12xi32> to vector<8x1xi32>
    %38 = vector.broadcast %37 : vector<8x1xi32> to vector<8x128xi32>
    %39 = arith.cmpi eq, %1, %38 : vector<8x128xi32>
    %cst_10 = arith.constant 1.000000e+00 : f32
    %cst_11 = arith.constant 0.000000e+00 : f32
    %40 = vector.broadcast %cst_10 : f32 to vector<8x128xf32>
    %41 = vector.broadcast %cst_11 : f32 to vector<8x128xf32>
    %42 = arith.select %39, %40, %41 : vector<8x128xi1>, vector<8x128xf32>
    %43 = arith.truncf %42 : vector<8x128xf32> to vector<8x128xbf16>
    %44 = vector.extract_strided_slice %0 {offsets = [0, 6], sizes = [8, 1], strides = [1, 1]} : vector<8x12xi32> to vector<8x1xi32>
    %45 = vector.broadcast %44 : vector<8x1xi32> to vector<8x128xi32>
    %46 = arith.cmpi eq, %1, %45 : vector<8x128xi32>
    %cst_12 = arith.constant 1.000000e+00 : f32
    %cst_13 = arith.constant 0.000000e+00 : f32
    %47 = vector.broadcast %cst_12 : f32 to vector<8x128xf32>
    %48 = vector.broadcast %cst_13 : f32 to vector<8x128xf32>
    %49 = arith.select %46, %47, %48 : vector<8x128xi1>, vector<8x128xf32>
    %50 = arith.truncf %49 : vector<8x128xf32> to vector<8x128xbf16>
    %51 = vector.extract_strided_slice %0 {offsets = [0, 7], sizes = [8, 1], strides = [1, 1]} : vector<8x12xi32> to vector<8x1xi32>
    %52 = vector.broadcast %51 : vector<8x1xi32> to vector<8x128xi32>
    %53 = arith.cmpi eq, %1, %52 : vector<8x128xi32>
    %cst_14 = arith.constant 1.000000e+00 : f32
    %cst_15 = arith.constant 0.000000e+00 : f32
    %54 = vector.broadcast %cst_14 : f32 to vector<8x128xf32>
    %55 = vector.broadcast %cst_15 : f32 to vector<8x128xf32>
    %56 = arith.select %53, %54, %55 : vector<8x128xi1>, vector<8x128xf32>
    %57 = arith.truncf %56 : vector<8x128xf32> to vector<8x128xbf16>
    %58 = vector.extract_strided_slice %0 {offsets = [0, 8], sizes = [8, 1], strides = [1, 1]} : vector<8x12xi32> to vector<8x1xi32>
    %59 = vector.broadcast %58 : vector<8x1xi32> to vector<8x128xi32>
    %60 = arith.cmpi eq, %1, %59 : vector<8x128xi32>
    %cst_16 = arith.constant 1.000000e+00 : f32
    %cst_17 = arith.constant 0.000000e+00 : f32
    %61 = vector.broadcast %cst_16 : f32 to vector<8x128xf32>
    %62 = vector.broadcast %cst_17 : f32 to vector<8x128xf32>
    %63 = arith.select %60, %61, %62 : vector<8x128xi1>, vector<8x128xf32>
    %64 = arith.truncf %63 : vector<8x128xf32> to vector<8x128xbf16>
    %65 = vector.extract_strided_slice %0 {offsets = [0, 9], sizes = [8, 1], strides = [1, 1]} : vector<8x12xi32> to vector<8x1xi32>
    %66 = vector.broadcast %65 : vector<8x1xi32> to vector<8x128xi32>
    %67 = arith.cmpi eq, %1, %66 : vector<8x128xi32>
    %cst_18 = arith.constant 1.000000e+00 : f32
    %cst_19 = arith.constant 0.000000e+00 : f32
    %68 = vector.broadcast %cst_18 : f32 to vector<8x128xf32>
    %69 = vector.broadcast %cst_19 : f32 to vector<8x128xf32>
    %70 = arith.select %67, %68, %69 : vector<8x128xi1>, vector<8x128xf32>
    %71 = arith.truncf %70 : vector<8x128xf32> to vector<8x128xbf16>
    %72 = vector.extract_strided_slice %0 {offsets = [0, 10], sizes = [8, 1], strides = [1, 1]} : vector<8x12xi32> to vector<8x1xi32>
    %73 = vector.broadcast %72 : vector<8x1xi32> to vector<8x128xi32>
    %74 = arith.cmpi eq, %1, %73 : vector<8x128xi32>
    %cst_20 = arith.constant 1.000000e+00 : f32
    %cst_21 = arith.constant 0.000000e+00 : f32
    %75 = vector.broadcast %cst_20 : f32 to vector<8x128xf32>
    %76 = vector.broadcast %cst_21 : f32 to vector<8x128xf32>
    %77 = arith.select %74, %75, %76 : vector<8x128xi1>, vector<8x128xf32>
    %78 = arith.truncf %77 : vector<8x128xf32> to vector<8x128xbf16>
    %79 = vector.extract_strided_slice %0 {offsets = [0, 11], sizes = [8, 1], strides = [1, 1]} : vector<8x12xi32> to vector<8x1xi32>
    %80 = vector.broadcast %79 : vector<8x1xi32> to vector<8x128xi32>
    %81 = arith.cmpi eq, %1, %80 : vector<8x128xi32>
    %cst_22 = arith.constant 1.000000e+00 : f32
    %cst_23 = arith.constant 0.000000e+00 : f32
    %82 = vector.broadcast %cst_22 : f32 to vector<8x128xf32>
    %83 = vector.broadcast %cst_23 : f32 to vector<8x128xf32>
    %84 = arith.select %81, %82, %83 : vector<8x128xi1>, vector<8x128xf32>
    %85 = arith.truncf %84 : vector<8x128xf32> to vector<8x128xbf16>
    %86 = tpu.concatenate %8, %15, %22, %29, %36, %43, %50, %57, %64, %71, %78, %85 in 0 : vector<8x128xbf16>, vector<8x128xbf16>, vector<8x128xbf16>, vector<8x128xbf16>, vector<8x128xbf16>, vector<8x128xbf16>, vector<8x128xbf16>, vector<8x128xbf16>, vector<8x128xbf16>, vector<8x128xbf16>, vector<8x128xbf16>, vector<8x128xbf16> -> vector<96x128xbf16>
    %87 = vector.extract_strided_slice %86 {offsets = [0, 0], sizes = [64, 128], strides = [1, 1]} : vector<96x128xbf16> to vector<64x128xbf16>
    %c0_24 = arith.constant 0 : index
    %c0_25 = arith.constant 0 : index
    %c0_26 = arith.constant 0 : index
    %88 = vector.load %arg2[%c0_24, %c0_25, %c0_26] : memref<5x128x128xbf16, #tpu.memory_space<vmem>>, vector<1x128x128xbf16>
    %89 = vector.shape_cast %88 : vector<1x128x128xbf16> to vector<128x128xbf16>
    %cst_27 = arith.constant dense<0.000000e+00> : vector<64x128xf32>
    %90 = tpu.matmul %87, %89, %cst_27 {dimension_numbers = #tpu.dot_dimension_numbers<[1], [0], [0], [1], [0, 0, 1, 1], [], []>} : vector<64x128xbf16>, vector<128x128xbf16>, vector<64x128xf32> -> vector<64x128xf32>
    %91 = vector.extract_strided_slice %86 {offsets = [8, 0], sizes = [64, 128], strides = [1, 1]} : vector<96x128xbf16> to vector<64x128xbf16>
    %c1 = arith.constant 1 : index
    %c0_28 = arith.constant 0 : index
    %c0_29 = arith.constant 0 : index
    %92 = vector.load %arg2[%c1, %c0_28, %c0_29] : memref<5x128x128xbf16, #tpu.memory_space<vmem>>, vector<1x128x128xbf16>
    %93 = vector.shape_cast %92 : vector<1x128x128xbf16> to vector<128x128xbf16>
    %cst_30 = arith.constant dense<0.000000e+00> : vector<64x128xf32>
    %94 = tpu.matmul %91, %93, %cst_30 {dimension_numbers = #tpu.dot_dimension_numbers<[1], [0], [0], [1], [0, 0, 1, 1], [], []>} : vector<64x128xbf16>, vector<128x128xbf16>, vector<64x128xf32> -> vector<64x128xf32>
    %95 = arith.addf %90, %94 : vector<64x128xf32>
    %96 = vector.extract_strided_slice %86 {offsets = [16, 0], sizes = [64, 128], strides = [1, 1]} : vector<96x128xbf16> to vector<64x128xbf16>
    %c2 = arith.constant 2 : index
    %c0_31 = arith.constant 0 : index
    %c0_32 = arith.constant 0 : index
    %97 = vector.load %arg2[%c2, %c0_31, %c0_32] : memref<5x128x128xbf16, #tpu.memory_space<vmem>>, vector<1x128x128xbf16>
    %98 = vector.shape_cast %97 : vector<1x128x128xbf16> to vector<128x128xbf16>
    %cst_33 = arith.constant dense<0.000000e+00> : vector<64x128xf32>
    %99 = tpu.matmul %96, %98, %cst_33 {dimension_numbers = #tpu.dot_dimension_numbers<[1], [0], [0], [1], [0, 0, 1, 1], [], []>} : vector<64x128xbf16>, vector<128x128xbf16>, vector<64x128xf32> -> vector<64x128xf32>
    %100 = arith.addf %95, %99 : vector<64x128xf32>
    %101 = vector.extract_strided_slice %86 {offsets = [24, 0], sizes = [64, 128], strides = [1, 1]} : vector<96x128xbf16> to vector<64x128xbf16>
    %c3 = arith.constant 3 : index
    %c0_34 = arith.constant 0 : index
    %c0_35 = arith.constant 0 : index
    %102 = vector.load %arg2[%c3, %c0_34, %c0_35] : memref<5x128x128xbf16, #tpu.memory_space<vmem>>, vector<1x128x128xbf16>
    %103 = vector.shape_cast %102 : vector<1x128x128xbf16> to vector<128x128xbf16>
    %cst_36 = arith.constant dense<0.000000e+00> : vector<64x128xf32>
    %104 = tpu.matmul %101, %103, %cst_36 {dimension_numbers = #tpu.dot_dimension_numbers<[1], [0], [0], [1], [0, 0, 1, 1], [], []>} : vector<64x128xbf16>, vector<128x128xbf16>, vector<64x128xf32> -> vector<64x128xf32>
    %105 = arith.addf %100, %104 : vector<64x128xf32>
    %106 = vector.extract_strided_slice %86 {offsets = [32, 0], sizes = [64, 128], strides = [1, 1]} : vector<96x128xbf16> to vector<64x128xbf16>
    %c4 = arith.constant 4 : index
    %c0_37 = arith.constant 0 : index
    %c0_38 = arith.constant 0 : index
    %107 = vector.load %arg2[%c4, %c0_37, %c0_38] : memref<5x128x128xbf16, #tpu.memory_space<vmem>>, vector<1x128x128xbf16>
    %108 = vector.shape_cast %107 : vector<1x128x128xbf16> to vector<128x128xbf16>
    %cst_39 = arith.constant dense<0.000000e+00> : vector<64x128xf32>
    %109 = tpu.matmul %106, %108, %cst_39 {dimension_numbers = #tpu.dot_dimension_numbers<[1], [0], [0], [1], [0, 0, 1, 1], [], []>} : vector<64x128xbf16>, vector<128x128xbf16>, vector<64x128xf32> -> vector<64x128xf32>
    %110 = arith.addf %105, %109 : vector<64x128xf32>
    %c0_40 = arith.constant 0 : index
    %c0_41 = arith.constant 0 : index
    %111 = vector.load %arg3[%c0_40, %c0_41] : memref<1x128xf32, #tpu.memory_space<vmem>>, vector<1x128xf32>
    %112 = vector.broadcast %111 : vector<1x128xf32> to vector<64x128xf32>
    %113 = arith.addf %110, %112 : vector<64x128xf32>
    %cst_42 = arith.constant 0.000000e+00 : f32
    %114 = vector.broadcast %cst_42 : f32 to vector<64x128xf32>
    %115 = arith.maximumf %113, %114 : vector<64x128xf32>
    %116 = vector.extract_strided_slice %115 {offsets = [0, 0], sizes = [8, 128], strides = [1, 1]} : vector<64x128xf32> to vector<8x128xf32>
    %117 = vector.extract_strided_slice %115 {offsets = [8, 0], sizes = [8, 128], strides = [1, 1]} : vector<64x128xf32> to vector<8x128xf32>
    %118 = vector.extract_strided_slice %115 {offsets = [16, 0], sizes = [8, 128], strides = [1, 1]} : vector<64x128xf32> to vector<8x128xf32>
    %119 = vector.extract_strided_slice %115 {offsets = [24, 0], sizes = [8, 128], strides = [1, 1]} : vector<64x128xf32> to vector<8x128xf32>
    %120 = vector.extract_strided_slice %115 {offsets = [32, 0], sizes = [8, 128], strides = [1, 1]} : vector<64x128xf32> to vector<8x128xf32>
    %121 = vector.extract_strided_slice %115 {offsets = [40, 0], sizes = [8, 128], strides = [1, 1]} : vector<64x128xf32> to vector<8x128xf32>
    %122 = vector.extract_strided_slice %115 {offsets = [48, 0], sizes = [8, 128], strides = [1, 1]} : vector<64x128xf32> to vector<8x128xf32>
    %123 = vector.extract_strided_slice %115 {offsets = [56, 0], sizes = [8, 128], strides = [1, 1]} : vector<64x128xf32> to vector<8x128xf32>
    %124 = arith.maximumf %116, %117 : vector<8x128xf32>
    %125 = arith.maximumf %118, %119 : vector<8x128xf32>
    %126 = arith.maximumf %120, %121 : vector<8x128xf32>
    %127 = arith.maximumf %122, %123 : vector<8x128xf32>
    %128 = arith.maximumf %124, %125 : vector<8x128xf32>
    %129 = arith.maximumf %126, %127 : vector<8x128xf32>
    %130 = arith.maximumf %128, %129 : vector<8x128xf32>
    %131 = arith.truncf %130 : vector<8x128xf32> to vector<8x128xbf16>
    %c0_43 = arith.constant 0 : index
    %c0_44 = arith.constant 0 : index
    %132 = vector.load %arg4[%c0_43, %c0_44] : memref<128x256xbf16, #tpu.memory_space<vmem>>, vector<128x256xbf16>
    %cst_45 = arith.constant dense<0.000000e+00> : vector<8x256xf32>
    %133 = tpu.matmul %131, %132, %cst_45 {dimension_numbers = #tpu.dot_dimension_numbers<[1], [0], [0], [1], [0, 0, 1, 1], [], []>} : vector<8x128xbf16>, vector<128x256xbf16>, vector<8x256xf32> -> vector<8x256xf32>
    %c0_46 = arith.constant 0 : index
    %c0_47 = arith.constant 0 : index
    %134 = vector.load %arg5[%c0_46, %c0_47] : memref<1x256xf32, #tpu.memory_space<vmem>>, vector<1x256xf32>
    %135 = vector.broadcast %134 : vector<1x256xf32> to vector<8x256xf32>
    %136 = arith.addf %133, %135 : vector<8x256xf32>
    %137 = vector.extract_strided_slice %136 {offsets = [0, 0], sizes = [8, 128], strides = [1, 1]} : vector<8x256xf32> to vector<8x128xf32>
    %cst_48 = arith.constant 0.000000e+00 : f32
    %138 = vector.broadcast %cst_48 : f32 to vector<8x128xf32>
    %139 = arith.maximumf %137, %138 : vector<8x128xf32>
    %140 = vector.extract_strided_slice %136 {offsets = [0, 128], sizes = [8, 128], strides = [1, 1]} : vector<8x256xf32> to vector<8x128xf32>
    %cst_49 = arith.constant 0.000000e+00 : f32
    %141 = vector.broadcast %cst_49 : f32 to vector<8x128xf32>
    %142 = arith.subf %141, %140 : vector<8x128xf32>
    %143 = math.exp %142 : vector<8x128xf32>
    %cst_50 = arith.constant 1.000000e+00 : f32
    %144 = vector.broadcast %cst_50 : f32 to vector<8x128xf32>
    %145 = arith.addf %144, %143 : vector<8x128xf32>
    %cst_51 = arith.constant 1.000000e+00 : f32
    %146 = vector.broadcast %cst_51 : f32 to vector<8x128xf32>
    %147 = arith.divf %146, %145 : vector<8x128xf32>
    %148 = arith.mulf %147, %139 : vector<8x128xf32>
    %cst_52 = arith.constant 1.000000e+00 : f32
    %149 = vector.broadcast %cst_52 : f32 to vector<8x128xf32>
    %150 = arith.subf %149, %147 : vector<8x128xf32>
    %151 = arith.mulf %150, %130 : vector<8x128xf32>
    %152 = arith.addf %148, %151 : vector<8x128xf32>
    %c0_53 = arith.constant 0 : index
    %c0_54 = arith.constant 0 : index
    %153 = vector.load %arg6[%c0_53, %c0_54] : memref<8x128xf32, #tpu.memory_space<vmem>>, vector<8x128xf32>
    tpu.vector_store %arg6[%c0_53, %c0_54], %152 {strides = array<i32>} : memref<8x128xf32, #tpu.memory_space<vmem>>, vector<8x128xf32>,
    return
  }
  func.func @transform_0(%arg0: i32) -> (i32, i32) {
    %c0_i32 = arith.constant 0 : i32
    %c0_i32_0 = arith.constant 0 : i32
    return %arg0, %c0_i32 : i32, i32
  }
  func.func @transform_1(%arg0: i32) -> (i32, i32, i32) {
    %c0_i32 = arith.constant 0 : i32
    %c0_i32_0 = arith.constant 0 : i32
    %c0_i32_1 = arith.constant 0 : i32
    %c0_i32_2 = arith.constant 0 : i32
    return %c0_i32, %c0_i32_0, %c0_i32_1 : i32, i32, i32
  }
  func.func @transform_2(%arg0: i32) -> (i32, i32) {
    %c0_i32 = arith.constant 0 : i32
    %c0_i32_0 = arith.constant 0 : i32
    %c0_i32_1 = arith.constant 0 : i32
    return %c0_i32, %c0_i32_0 : i32, i32
  }
  func.func @transform_3(%arg0: i32) -> (i32, i32) {
    %c0_i32 = arith.constant 0 : i32
    %c0_i32_0 = arith.constant 0 : i32
    %c0_i32_1 = arith.constant 0 : i32
    return %c0_i32, %c0_i32_0 : i32, i32
  }
  func.func @transform_4(%arg0: i32) -> (i32, i32) {
    %c0_i32 = arith.constant 0 : i32
    %c0_i32_0 = arith.constant 0 : i32
    %c0_i32_1 = arith.constant 0 : i32
    return %c0_i32, %c0_i32_0 : i32, i32
  }
  func.func @transform_5(%arg0: i32) -> (i32, i32) {
    %c0_i32 = arith.constant 0 : i32
    %c0_i32_0 = arith.constant 0 : i32
    return %arg0, %c0_i32 : i32, i32
  }
}

</mosaic_0001>

<llo_original>
// kernel: tpu_custom_call.1
$region0: #{tpu_custom_call.1}
  #allocation0 [shape = 'u32[]', space=smem, size = 0x4, offset = 0x4, fixed_abs, tag = 'smem constant byte address 0x4 - core index']
  #allocation1 [shape = 'u32[144,128]{1,0:T(1,128)}', space=vmem, size = 0x12000, scoped, tag = 'internal scratch']
  %s0 = inlined_call_operand.hbm [shape: s32[8,12], index: 0, kind: input, shape index: {}]
  %s1 = inlined_call_operand.hbm [shape: bf16[5,128,128], index: 1, kind: input, shape index: {}]
  %s2 = inlined_call_operand.vmem [shape: f32[1,128], index: 2, kind: input, shape index: {}]
  %s3 = inlined_call_operand.hbm [shape: bf16[128,256], index: 3, kind: input, shape index: {}]
  %s4 = inlined_call_operand.vmem [shape: f32[1,256], index: 4, kind: input, shape index: {}]
  %s5 = inlined_call_operand.hbm [shape: f32[8,128], index: 5, kind: output, shape index: {}]
  %s6 = sld [smem:[#allocation0]]
  $region42: #{tpu_custom_call.1} parent=0
    _
  %s8 = ssub.s32 1, %s6
  %s9 = scalar_select 0, %s8, %s6
  $region1: #{tpu_custom_call.1} parent=0
    #allocation2 [shape = 'u8[4096]{0}', space=vmem, size = 0x1000, scoped, tag = 'input window, operand 0, single buffered']
    #allocation3 [shape = 's32[1]{0}', space=sflag, size = 0x4, scoped, tag = 'scoped memory for tpu_custom_call.1']
    #allocation4 [shape = 's32[1]{0}', space=sflag, size = 0x4, scoped, tag = 'scoped memory for tpu_custom_call.1']
    #allocation5 [shape = 'u8[163840]{0}', space=vmem, size = 0x28000, scoped, tag = 'input window, operand 1, single buffered']
    #allocation6 [shape = 's32[1]{0}', space=sflag, size = 0x4, scoped, tag = 'scoped memory for tpu_custom_call.1']
    #allocation7 [shape = 'u8[65536]{0}', space=vmem, size = 0x10000, scoped, tag = 'input window, operand 3, single buffered']
    #allocation8 [shape = 'u8[4096]{0}', space=vmem, size = 0x1000, scoped, tag = 'output window, operand 0, single buffered']
    %10 = vsyncpa [#allocation3], 0
    %11 = vsyncpa [#allocation6], 0
    %12 = vsyncpa [#allocation4], 0
    // Predicated region
    $region2: #{tpu_custom_call.1} parent=1 // pred_check
      _
    $region3: #{tpu_custom_call.1} parent=1 // pred_check_branch
      %14 = sbr.rel (0) target = $region5
    $region4: #{tpu_custom_call.1} parent=1 // pred_region
      %s16 = ssub.s32 128, 128
      %17 = vsyncadd [#allocation3], %s16
      %s19 = sshll.u32 [#allocation2], 4
      %s20 = int_to_ptr.vmem [resolvable:$true] %s19
      %22 = dma.hbm_to_vmem [thread:$0]  %s0, 128, %s20, [#allocation3]
    $region5: #{tpu_custom_call.1} parent=1 // pred_fallthru
      _
    // Predicated region
    $region6: #{tpu_custom_call.1} parent=1 // pred_check
      _
    $region7: #{tpu_custom_call.1} parent=1 // pred_check_branch
      %24 = sbr.rel (0) target = $region9
    $region8: #{tpu_custom_call.1} parent=1 // pred_region
      %s26 = ssub.s32 5120, 5120
      %27 = vsyncadd [#allocation6], %s26
      %s28 = sshll.u32 [#allocation5], 4
      %s29 = int_to_ptr.vmem [resolvable:$true] %s28
      %34 = dma.hbm_to_vmem [thread:$0]  %s1, 5120, %s29, [#allocation6], 64, 64, 4
    $region9: #{tpu_custom_call.1} parent=1 // pred_fallthru
      _
    // Predicated region
    $region10: #{tpu_custom_call.1} parent=1 // pred_check
      _
    $region11: #{tpu_custom_call.1} parent=1 // pred_check_branch
      %36 = sbr.rel (0) target = $region13
    $region12: #{tpu_custom_call.1} parent=1 // pred_region
      _
    $region13: #{tpu_custom_call.1} parent=1 // pred_fallthru
      _
    // Predicated region
    $region14: #{tpu_custom_call.1} parent=1 // pred_check
      _
    $region15: #{tpu_custom_call.1} parent=1 // pred_check_branch
      %38 = sbr.rel (0) target = $region17
    $region16: #{tpu_custom_call.1} parent=1 // pred_region
      %s40 = ssub.s32 2048, 2048
      %41 = vsyncadd [#allocation6], %s40
      %s42 = sshll.u32 [#allocation7], 4
      %s43 = int_to_ptr.vmem [resolvable:$true] %s42
      %48 = dma.hbm_to_vmem [thread:$0]  %s3, 2048, %s43, [#allocation6], 128, 128, 8
    $region17: #{tpu_custom_call.1} parent=1 // pred_fallthru
      _
    // Predicated region
    $region18: #{tpu_custom_call.1} parent=1 // pred_check
      _
    $region19: #{tpu_custom_call.1} parent=1 // pred_check_branch
      %50 = sbr.rel (0) target = $region21
    $region20: #{tpu_custom_call.1} parent=1 // pred_region
      _
    $region21: #{tpu_custom_call.1} parent=1 // pred_fallthru
      _
    // Predicated region
    $region22: #{tpu_custom_call.1} parent=1 // pred_check
      _
    $region23: #{tpu_custom_call.1} parent=1 // pred_check_branch
      %52 = sbr.rel (0) target = $region25
    $region24: #{tpu_custom_call.1} parent=1 // pred_region
      %53 = dma.done [#allocation3], 128
    $region25: #{tpu_custom_call.1} parent=1 // pred_fallthru
      _
    // Predicated region
    $region26: #{tpu_custom_call.1} parent=1 // pred_check
      _
    $region27: #{tpu_custom_call.1} parent=1 // pred_check_branch
      %55 = sbr.rel (0) target = $region29
    $region28: #{tpu_custom_call.1} parent=1 // pred_region
      %56 = dma.done [#allocation6], 5120
    $region29: #{tpu_custom_call.1} parent=1 // pred_fallthru
      _
    // Predicated region
    $region30: #{tpu_custom_call.1} parent=1 // pred_check
      _
    $region31: #{tpu_custom_call.1} parent=1 // pred_check_branch
      %58 = sbr.rel (0) target = $region33
    $region32: #{tpu_custom_call.1} parent=1 // pred_region
      %59 = dma.done [#allocation6], 2048
    $region33: #{tpu_custom_call.1} parent=1 // pred_fallthru
      _
    %v61 = vld [vmem:[#allocation2] sm:$0xff]
    %v62 = vlaneseq
    %v63 = vand.u32 %v62, 127
    %64 = vset.pattern.permute.xlu0 0
    %65 = vperm.xlu0 %64, %v61
    %v66 = vpop.permute.xlu0 %65
    %vm67 = vcmp.eq.s32.totalorder %v63, %v66
    %v68 = vsel %vm67, 1.0, 0.0
    %v69 = vpack.c.bf16 %v68, %v68
    %70 = vset.pattern.permute.xlu0 1
    %71 = vperm.xlu0 %70, %v61
    %v72 = vpop.permute.xlu0 %71
    %vm73 = vcmp.eq.s32.totalorder %v63, %v72
    %v74 = vsel %vm73, 1.0, 0.0
    %v75 = vpack.c.bf16 %v74, %v74
    %76 = vset.pattern.permute.xlu0 2
    %77 = vperm.xlu0 %76, %v61
    %v78 = vpop.permute.xlu0 %77
    %vm79 = vcmp.eq.s32.totalorder %v63, %v78
    %v80 = vsel %vm79, 1.0, 0.0
    %v81 = vpack.c.bf16 %v80, %v80
    %82 = vset.pattern.permute.xlu0 3
    %83 = vperm.xlu0 %82, %v61
    %v84 = vpop.permute.xlu0 %83
    %vm85 = vcmp.eq.s32.totalorder %v63, %v84
    %v86 = vsel %vm85, 1.0, 0.0
    %v87 = vpack.c.bf16 %v86, %v86
    %88 = vset.pattern.permute.xlu0 4
    %89 = vperm.xlu0 %88, %v61
    %v90 = vpop.permute.xlu0 %89
    %vm91 = vcmp.eq.s32.totalorder %v63, %v90
    %v92 = vsel %vm91, 1.0, 0.0
    %v93 = vpack.c.bf16 %v92, %v92
    %94 = vset.pattern.permute.xlu0 5
    %95 = vperm.xlu0 %94, %v61
    %v96 = vpop.permute.xlu0 %95
    %vm97 = vcmp.eq.s32.totalorder %v63, %v96
    %v98 = vsel %vm97, 1.0, 0.0
    %v99 = vpack.c.bf16 %v98, %v98
    %100 = vset.pattern.permute.xlu0 6
    %101 = vperm.xlu0 %100, %v61
    %v102 = vpop.permute.xlu0 %101
    %vm103 = vcmp.eq.s32.totalorder %v63, %v102
    %v104 = vsel %vm103, 1.0, 0.0
    %v105 = vpack.c.bf16 %v104, %v104
    %106 = vset.pattern.permute.xlu0 7
    %107 = vperm.xlu0 %106, %v61
    %v108 = vpop.permute.xlu0 %107
    %vm109 = vcmp.eq.s32.totalorder %v63, %v108
    %v110 = vsel %vm109, 1.0, 0.0
    %v111 = vpack.c.bf16 %v110, %v110
    %112 = vset.pattern.permute.xlu0 8
    %113 = vperm.xlu0 %112, %v61
    %v114 = vpop.permute.xlu0 %113
    %vm115 = vcmp.eq.s32.totalorder %v63, %v114
    %v116 = vsel %vm115, 1.0, 0.0
    %v117 = vpack.c.bf16 %v116, %v116
    %118 = vset.pattern.permute.xlu0 9
    %119 = vperm.xlu0 %118, %v61
    %v120 = vpop.permute.xlu0 %119
    %vm121 = vcmp.eq.s32.totalorder %v63, %v120
    %v122 = vsel %vm121, 1.0, 0.0
    %v123 = vpack.c.bf16 %v122, %v122
    %124 = vset.pattern.permute.xlu0 10
    %125 = vperm.xlu0 %124, %v61
    %v126 = vpop.permute.xlu0 %125
    %vm127 = vcmp.eq.s32.totalorder %v63, %v126
    %v128 = vsel %vm127, 1.0, 0.0
    %v129 = vpack.c.bf16 %v128, %v128
    %130 = vset.pattern.permute.xlu0 11
    %131 = vperm.xlu0 %130, %v61
    %v132 = vpop.permute.xlu0 %131
    %vm133 = vcmp.eq.s32.totalorder %v63, %v132
    %v134 = vsel %vm133, 1.0, 0.0
    %v135 = vpack.c.bf16 %v134, %v134
    %v137 = vrot.slane %v75, 4
    %v139 = vrot.slane %v87, 4
    %v141 = vrot.slane %v99, 4
    %v143 = vrot.slane %v111, 4
    %v145 = vrot.slane %v123, 4
    %v147 = vrot.slane %v135, 4
    %vm148 = vcmask 1043456
    %v151 = vsel %vm148, %v69, %v137
    %v155 = vsel %vm148, %v81, %v139
    %v159 = vsel %vm148, %v93, %v141
    %v163 = vsel %vm148, %v105, %v143
    %v167 = vsel %vm148, %v117, %v145
    %v171 = vsel %vm148, %v129, %v147
    %v173 = vld [vmem:[#allocation5] sm:$0xf]
    %v174 = vld [vmem:[#allocation5 + $0x4] sm:$0xf]
    %v175 = vld [vmem:[#allocation5 + $0x8] sm:$0xf]
    %v176 = vld [vmem:[#allocation5 + $0xc] sm:$0xf]
    %v177 = vld [vmem:[#allocation5 + $0x10] sm:$0xf]
    %v178 = vld [vmem:[#allocation5 + $0x14] sm:$0xf]
    %v179 = vld [vmem:[#allocation5 + $0x18] sm:$0xf]
    %v180 = vld [vmem:[#allocation5 + $0x1c] sm:$0xf]
    %v181 = vld [vmem:[#allocation5 + $0x20] sm:$0xf]
    %v182 = vld [vmem:[#allocation5 + $0x24] sm:$0xf]
    %v183 = vld [vmem:[#allocation5 + $0x28] sm:$0xf]
    %v184 = vld [vmem:[#allocation5 + $0x2c] sm:$0xf]
    %v185 = vld [vmem:[#allocation5 + $0x30] sm:$0xf]
    %v186 = vld [vmem:[#allocation5 + $0x34] sm:$0xf]
    %v187 = vld [vmem:[#allocation5 + $0x38] sm:$0xf]
    %v188 = vld [vmem:[#allocation5 + $0x3c] sm:$0xf]
    %s189 = scalar_lea.vmem [#allocation5], 64
    %v190 = vld [vmem:[%s189] sm:$0xf]
    %v191 = vld [vmem:[%s189 + $0x4] sm:$0xf]
    %v192 = vld [vmem:[%s189 + $0x8] sm:$0xf]
    %v193 = vld [vmem:[%s189 + $0xc] sm:$0xf]
    %v194 = vld [vmem:[%s189 + $0x10] sm:$0xf]
    %v195 = vld [vmem:[%s189 + $0x14] sm:$0xf]
    %v196 = vld [vmem:[%s189 + $0x18] sm:$0xf]
    %v197 = vld [vmem:[%s189 + $0x1c] sm:$0xf]
    %v198 = vld [vmem:[%s189 + $0x20] sm:$0xf]
    %v199 = vld [vmem:[%s189 + $0x24] sm:$0xf]
    %v200 = vld [vmem:[%s189 + $0x28] sm:$0xf]
    %v201 = vld [vmem:[%s189 + $0x2c] sm:$0xf]
    %v202 = vld [vmem:[%s189 + $0x30] sm:$0xf]
    %v203 = vld [vmem:[%s189 + $0x34] sm:$0xf]
    %v204 = vld [vmem:[%s189 + $0x38] sm:$0xf]
    %v205 = vld [vmem:[%s189 + $0x3c] sm:$0xf]
    %vm211 = vcmask 1043456
    %v212 = vrot.slane %v151, 4
    %v213 = vrot.slane %v155, 4
    %v214 = vsel %vm211, %v212, %v213
    %v215 = vrot.slane %v159, 4
    %v216 = vsel %vm211, %v213, %v215
    %v217 = vrot.slane %v163, 4
    %v218 = vsel %vm211, %v215, %v217
    %v219 = vrot.slane %v167, 4
    %v220 = vsel %vm211, %v217, %v219
    %v241 = vunpack.c.l.b16 %v190
    %v242 = vunpack.c.l.b16 %v191
    %v243 = vunpack.c.l.b16 %v192
    %v244 = vunpack.c.l.b16 %v193
    %v245 = vunpack.c.l.b16 %v194
    %v246 = vunpack.c.l.b16 %v195
    %v247 = vunpack.c.l.b16 %v196
    %v248 = vunpack.c.l.b16 %v197
    %v249 = vunpack.c.l.b16 %v198
    %v250 = vunpack.c.l.b16 %v199
    %v251 = vunpack.c.l.b16 %v200
    %v252 = vunpack.c.l.b16 %v201
    %v253 = vunpack.c.l.b16 %v202
    %v254 = vunpack.c.l.b16 %v203
    %v255 = vunpack.c.l.b16 %v204
    %v256 = vunpack.c.l.b16 %v205
    %v257 = vpack.c.b16 %v242, %v241
    %v258 = vpack.c.b16 %v244, %v243
    %v259 = vpack.c.b16 %v246, %v245
    %v260 = vpack.c.b16 %v248, %v247
    %v261 = vpack.c.b16 %v250, %v249
    %v262 = vpack.c.b16 %v252, %v251
    %v263 = vpack.c.b16 %v254, %v253
    %v264 = vpack.c.b16 %v256, %v255
    %273 = vmatprep.subr.bf16.mxu0 0
    %274 = vmatpush1.bf16.msra.mxu0 %v257
    %275 = vmatprep.subr.bf16.mxu0 0
    %276 = vmatpush1.bf16.msra.mxu0 %v258
    %277 = vmatprep.subr.bf16.mxu0 0
    %278 = vmatpush1.bf16.msra.mxu0 %v259
    %279 = vmatprep.subr.bf16.mxu0 0
    %280 = vmatpush1.bf16.msra.mxu0 %v260
    %281 = vmatprep.subr.bf16.mxu0 0
    %282 = vmatpush1.bf16.msra.mxu0 %v261
    %283 = vmatprep.subr.bf16.mxu0 0
    %284 = vmatpush1.bf16.msra.mxu0 %v262
    %285 = vmatprep.subr.bf16.mxu0 0
    %286 = vmatpush1.bf16.msra.mxu0 %v263
    %287 = vmatprep.subr.bf16.mxu0 0
    %288 = vmatpush1.bf16.msra.mxu0 %v264
    %289 = vmatprep.subr.bf16.mxu0 0
    %290 = vmatpush1.bf16.msra.mxu0 0
    %291 = vmatprep.subr.bf16.mxu0 0
    %292 = vmatpush1.bf16.msra.mxu0 0
    %293 = vmatprep.subr.bf16.mxu0 0
    %294 = vmatpush1.bf16.msra.mxu0 0
    %295 = vmatprep.subr.bf16.mxu0 0
    %296 = vmatpush1.bf16.msra.mxu0 0
    %297 = vmatprep.subr.bf16.mxu0 0
    %298 = vmatpush1.bf16.msra.mxu0 0
    %299 = vmatprep.subr.bf16.mxu0 0
    %300 = vmatpush1.bf16.msra.mxu0 0
    %301 = vmatprep.subr.bf16.mxu0 0
    %302 = vmatpush1.bf16.msra.mxu0 0
    %303 = vmatprep.subr.bf16.mxu0 0
    %304 = vmatpush1.bf16.msra.mxu0 0
    %305 = vmatprep.mubr.bf16.mxu0 0
    %306 = vmatmul.mubr.bf16.gmra.mrb[0].mxu0 %v214
    %v307 = vpop.f32.mrb[0].mxu0
    %v308 = vadd.f32 0.0, %v307
    %v309 = vpop.f32.mrb[0].mxu0
    %v310 = vpop.f32.mrb[0].mxu0
    %v311 = vadd.f32 0.0, %v310
    %v312 = vpop.f32.mrb[0].mxu0
    %313 = vmatprep.mubr.bf16.mxu0 0
    %314 = vmatmul.mubr.bf16.gmra.mrb[0].mxu0 %v216
    %v315 = vpop.f32.mrb[0].mxu0
    %v316 = vadd.f32 0.0, %v315
    %v317 = vpop.f32.mrb[0].mxu0
    %v318 = vpop.f32.mrb[0].mxu0
    %v319 = vadd.f32 0.0, %v318
    %v320 = vpop.f32.mrb[0].mxu0
    %321 = vmatprep.mubr.bf16.mxu0 0
    %322 = vmatmul.mubr.bf16.gmra.mrb[0].mxu0 %v218
    %v323 = vpop.f32.mrb[0].mxu0
    %v324 = vadd.f32 0.0, %v323
    %v325 = vpop.f32.mrb[0].mxu0
    %v326 = vpop.f32.mrb[0].mxu0
    %v327 = vadd.f32 0.0, %v326
    %v328 = vpop.f32.mrb[0].mxu0
    %329 = vmatprep.mubr.bf16.mxu0 0
    %330 = vmatmul.mubr.bf16.gmra.mrb[0].mxu0 %v220
    %v331 = vpop.f32.mrb[0].mxu0
    %v332 = vadd.f32 0.0, %v331
    %v333 = vpop.f32.mrb[0].mxu0
    %v334 = vpop.f32.mrb[0].mxu0
    %v335 = vadd.f32 0.0, %v334
    %v336 = vpop.f32.mrb[0].mxu0
    %337 = vdwg.mxu0
    %v354 = vunpack.c.l.b16 %v173
    %v355 = vunpack.c.l.b16 %v174
    %v356 = vunpack.c.l.b16 %v175
    %v357 = vunpack.c.l.b16 %v176
    %v358 = vunpack.c.l.b16 %v177
    %v359 = vunpack.c.l.b16 %v178
    %v360 = vunpack.c.l.b16 %v179
    %v361 = vunpack.c.l.b16 %v180
    %v362 = vunpack.c.l.b16 %v181
    %v363 = vunpack.c.l.b16 %v182
    %v364 = vunpack.c.l.b16 %v183
    %v365 = vunpack.c.l.b16 %v184
    %v366 = vunpack.c.l.b16 %v185
    %v367 = vunpack.c.l.b16 %v186
    %v368 = vunpack.c.l.b16 %v187
    %v369 = vunpack.c.l.b16 %v188
    %v370 = vpack.c.b16 %v355, %v354
    %v371 = vpack.c.b16 %v357, %v356
    %v372 = vpack.c.b16 %v359, %v358
    %v373 = vpack.c.b16 %v361, %v360
    %v374 = vpack.c.b16 %v363, %v362
    %v375 = vpack.c.b16 %v365, %v364
    %v376 = vpack.c.b16 %v367, %v366
    %v377 = vpack.c.b16 %v369, %v368
    %386 = vmatprep.subr.bf16.mxu0 0
    %387 = vmatpush1.bf16.msra.mxu0 %v370
    %388 = vmatprep.subr.bf16.mxu0 0
    %389 = vmatpush1.bf16.msra.mxu0 %v371
    %390 = vmatprep.subr.bf16.mxu0 0
    %391 = vmatpush1.bf16.msra.mxu0 %v372
    %392 = vmatprep.subr.bf16.mxu0 0
    %393 = vmatpush1.bf16.msra.mxu0 %v373
    %394 = vmatprep.subr.bf16.mxu0 0
    %395 = vmatpush1.bf16.msra.mxu0 %v374
    %396 = vmatprep.subr.bf16.mxu0 0
    %397 = vmatpush1.bf16.msra.mxu0 %v375
    %398 = vmatprep.subr.bf16.mxu0 0
    %399 = vmatpush1.bf16.msra.mxu0 %v376
    %400 = vmatprep.subr.bf16.mxu0 0
    %401 = vmatpush1.bf16.msra.mxu0 %v377
    %402 = vmatprep.subr.bf16.mxu0 0
    %403 = vmatpush1.bf16.msra.mxu0 0
    %404 = vmatprep.subr.bf16.mxu0 0
    %405 = vmatpush1.bf16.msra.mxu0 0
    %406 = vmatprep.subr.bf16.mxu0 0
    %407 = vmatpush1.bf16.msra.mxu0 0
    %408 = vmatprep.subr.bf16.mxu0 0
    %409 = vmatpush1.bf16.msra.mxu0 0
    %410 = vmatprep.subr.bf16.mxu0 0
    %411 = vmatpush1.bf16.msra.mxu0 0
    %412 = vmatprep.subr.bf16.mxu0 0
    %413 = vmatpush1.bf16.msra.mxu0 0
    %414 = vmatprep.subr.bf16.mxu0 0
    %415 = vmatpush1.bf16.msra.mxu0 0
    %416 = vmatprep.subr.bf16.mxu0 0
    %417 = vmatpush1.bf16.msra.mxu0 0
    %418 = vmatprep.mubr.bf16.mxu0 0
    %419 = vmatmul.mubr.bf16.gmra.mrb[0].mxu0 %v151
    %v420 = vpop.f32.mrb[0].mxu0
    %v421 = vadd.f32 %v308, %v420
    %v422 = vpop.f32.mrb[0].mxu0
    %v423 = vpop.f32.mrb[0].mxu0
    %v424 = vadd.f32 %v311, %v423
    %v425 = vpop.f32.mrb[0].mxu0
    %426 = vmatprep.mubr.bf16.mxu0 0
    %427 = vmatmul.mubr.bf16.gmra.mrb[0].mxu0 %v155
    %v428 = vpop.f32.mrb[0].mxu0
    %v429 = vadd.f32 %v316, %v428
    %v430 = vpop.f32.mrb[0].mxu0
    %v431 = vpop.f32.mrb[0].mxu0
    %v432 = vadd.f32 %v319, %v431
    %v433 = vpop.f32.mrb[0].mxu0
    %434 = vmatprep.mubr.bf16.mxu0 0
    %435 = vmatmul.mubr.bf16.gmra.mrb[0].mxu0 %v159
    %v436 = vpop.f32.mrb[0].mxu0
    %v437 = vadd.f32 %v324, %v436
    %v438 = vpop.f32.mrb[0].mxu0
    %v439 = vpop.f32.mrb[0].mxu0
    %v440 = vadd.f32 %v327, %v439
    %v441 = vpop.f32.mrb[0].mxu0
    %442 = vmatprep.mubr.bf16.mxu0 0
    %443 = vmatmul.mubr.bf16.gmra.mrb[0].mxu0 %v163
    %v444 = vpop.f32.mrb[0].mxu0
    %v445 = vadd.f32 %v332, %v444
    %v446 = vpop.f32.mrb[0].mxu0
    %v447 = vpop.f32.mrb[0].mxu0
    %v448 = vadd.f32 %v335, %v447
    %v449 = vpop.f32.mrb[0].mxu0
    %450 = vdwg.mxu0
    %s451 = scalar_lea.vmem [#allocation5], 128
    %v452 = vld [vmem:[%s451] sm:$0xf]
    %v453 = vld [vmem:[%s451 + $0x4] sm:$0xf]
    %v454 = vld [vmem:[%s451 + $0x8] sm:$0xf]
    %v455 = vld [vmem:[%s451 + $0xc] sm:$0xf]
    %v456 = vld [vmem:[%s451 + $0x10] sm:$0xf]
    %v457 = vld [vmem:[%s451 + $0x14] sm:$0xf]
    %v458 = vld [vmem:[%s451 + $0x18] sm:$0xf]
    %v459 = vld [vmem:[%s451 + $0x1c] sm:$0xf]
    %v460 = vld [vmem:[%s451 + $0x20] sm:$0xf]
    %v461 = vld [vmem:[%s451 + $0x24] sm:$0xf]
    %v462 = vld [vmem:[%s451 + $0x28] sm:$0xf]
    %v463 = vld [vmem:[%s451 + $0x2c] sm:$0xf]
    %v464 = vld [vmem:[%s451 + $0x30] sm:$0xf]
    %v465 = vld [vmem:[%s451 + $0x34] sm:$0xf]
    %v466 = vld [vmem:[%s451 + $0x38] sm:$0xf]
    %v467 = vld [vmem:[%s451 + $0x3c] sm:$0xf]
    %v484 = vunpack.c.l.b16 %v452
    %v485 = vunpack.c.l.b16 %v453
    %v486 = vunpack.c.l.b16 %v454
    %v487 = vunpack.c.l.b16 %v455
    %v488 = vunpack.c.l.b16 %v456
    %v489 = vunpack.c.l.b16 %v457
    %v490 = vunpack.c.l.b16 %v458
    %v491 = vunpack.c.l.b16 %v459
    %v492 = vunpack.c.l.b16 %v460
    %v493 = vunpack.c.l.b16 %v461
    %v494 = vunpack.c.l.b16 %v462
    %v495 = vunpack.c.l.b16 %v463
    %v496 = vunpack.c.l.b16 %v464
    %v497 = vunpack.c.l.b16 %v465
    %v498 = vunpack.c.l.b16 %v466
    %v499 = vunpack.c.l.b16 %v467
    %v500 = vpack.c.b16 %v485, %v484
    %v501 = vpack.c.b16 %v487, %v486
    %v502 = vpack.c.b16 %v489, %v488
    %v503 = vpack.c.b16 %v491, %v490
    %v504 = vpack.c.b16 %v493, %v492
    %v505 = vpack.c.b16 %v495, %v494
    %v506 = vpack.c.b16 %v497, %v496
    %v507 = vpack.c.b16 %v499, %v498
    %516 = vmatprep.subr.bf16.mxu0 0
    %517 = vmatpush1.bf16.msra.mxu0 %v500
    %518 = vmatprep.subr.bf16.mxu0 0
    %519 = vmatpush1.bf16.msra.mxu0 %v501
    %520 = vmatprep.subr.bf16.mxu0 0
    %521 = vmatpush1.bf16.msra.mxu0 %v502
    %522 = vmatprep.subr.bf16.mxu0 0
    %523 = vmatpush1.bf16.msra.mxu0 %v503
    %524 = vmatprep.subr.bf16.mxu0 0
    %525 = vmatpush1.bf16.msra.mxu0 %v504
    %526 = vmatprep.subr.bf16.mxu0 0
    %527 = vmatpush1.bf16.msra.mxu0 %v505
    %528 = vmatprep.subr.bf16.mxu0 0
    %529 = vmatpush1.bf16.msra.mxu0 %v506
    %530 = vmatprep.subr.bf16.mxu0 0
    %531 = vmatpush1.bf16.msra.mxu0 %v507
    %532 = vmatprep.subr.bf16.mxu0 0
    %533 = vmatpush1.bf16.msra.mxu0 0
    %534 = vmatprep.subr.bf16.mxu0 0
    %535 = vmatpush1.bf16.msra.mxu0 0
    %536 = vmatprep.subr.bf16.mxu0 0
    %537 = vmatpush1.bf16.msra.mxu0 0
    %538 = vmatprep.subr.bf16.mxu0 0
    %539 = vmatpush1.bf16.msra.mxu0 0
    %540 = vmatprep.subr.bf16.mxu0 0
    %541 = vmatpush1.bf16.msra.mxu0 0
    %542 = vmatprep.subr.bf16.mxu0 0
    %543 = vmatpush1.bf16.msra.mxu0 0
    %544 = vmatprep.subr.bf16.mxu0 0
    %545 = vmatpush1.bf16.msra.mxu0 0
    %546 = vmatprep.subr.bf16.mxu0 0
    %547 = vmatpush1.bf16.msra.mxu0 0
    %548 = vmatprep.mubr.bf16.mxu0 0
    %549 = vmatmul.mubr.bf16.gmra.mrb[0].mxu0 %v155
    %v550 = vpop.f32.mrb[0].mxu0
    %v551 = vadd.f32 0.0, %v550
    %v552 = vpop.f32.mrb[0].mxu0
    %v553 = vpop.f32.mrb[0].mxu0
    %v554 = vadd.f32 0.0, %v553
    %v555 = vpop.f32.mrb[0].mxu0
    %556 = vmatprep.mubr.bf16.mxu0 0
    %557 = vmatmul.mubr.bf16.gmra.mrb[0].mxu0 %v159
    %v558 = vpop.f32.mrb[0].mxu0
    %v559 = vadd.f32 0.0, %v558
    %v560 = vpop.f32.mrb[0].mxu0
    %v561 = vpop.f32.mrb[0].mxu0
    %v562 = vadd.f32 0.0, %v561
    %v563 = vpop.f32.mrb[0].mxu0
    %564 = vmatprep.mubr.bf16.mxu0 0
    %565 = vmatmul.mubr.bf16.gmra.mrb[0].mxu0 %v163
    %v566 = vpop.f32.mrb[0].mxu0
    %v567 = vadd.f32 0.0, %v566
    %v568 = vpop.f32.mrb[0].mxu0
    %v569 = vpop.f32.mrb[0].mxu0
    %v570 = vadd.f32 0.0, %v569
    %v571 = vpop.f32.mrb[0].mxu0
    %572 = vmatprep.mubr.bf16.mxu0 0
    %573 = vmatmul.mubr.bf16.gmra.mrb[0].mxu0 %v167
    %v574 = vpop.f32.mrb[0].mxu0
    %v575 = vadd.f32 0.0, %v574
    %v576 = vpop.f32.mrb[0].mxu0
    %v577 = vpop.f32.mrb[0].mxu0
    %v578 = vadd.f32 0.0, %v577
    %v579 = vpop.f32.mrb[0].mxu0
    %580 = vdwg.mxu0
    %v581 = vadd.f32 %v421, %v551
    %v582 = vadd.f32 %v424, %v554
    %v583 = vadd.f32 %v429, %v559
    %v584 = vadd.f32 %v432, %v562
    %v585 = vadd.f32 %v437, %v567
    %v586 = vadd.f32 %v440, %v570
    %v587 = vadd.f32 %v445, %v575
    %v588 = vadd.f32 %v448, %v578
    %s589 = scalar_lea.vmem [#allocation5], 192
    %v590 = vld [vmem:[%s589] sm:$0xf]
    %v591 = vld [vmem:[%s589 + $0x4] sm:$0xf]
    %v592 = vld [vmem:[%s589 + $0x8] sm:$0xf]
    %v593 = vld [vmem:[%s589 + $0xc] sm:$0xf]
    %v594 = vld [vmem:[%s589 + $0x10] sm:$0xf]
    %v595 = vld [vmem:[%s589 + $0x14] sm:$0xf]
    %v596 = vld [vmem:[%s589 + $0x18] sm:$0xf]
    %v597 = vld [vmem:[%s589 + $0x1c] sm:$0xf]
    %v598 = vld [vmem:[%s589 + $0x20] sm:$0xf]
    %v599 = vld [vmem:[%s589 + $0x24] sm:$0xf]
    %v600 = vld [vmem:[%s589 + $0x28] sm:$0xf]
    %v601 = vld [vmem:[%s589 + $0x2c] sm:$0xf]
    %v602 = vld [vmem:[%s589 + $0x30] sm:$0xf]
    %v603 = vld [vmem:[%s589 + $0x34] sm:$0xf]
    %v604 = vld [vmem:[%s589 + $0x38] sm:$0xf]
    %v605 = vld [vmem:[%s589 + $0x3c] sm:$0xf]
    %v607 = vrot.slane %v171, 4
    %v608 = vsel %vm211, %v219, %v607
    %v626 = vunpack.c.l.b16 %v590
    %v627 = vunpack.c.l.b16 %v591
    %v628 = vunpack.c.l.b16 %v592
    %v629 = vunpack.c.l.b16 %v593
    %v630 = vunpack.c.l.b16 %v594
    %v631 = vunpack.c.l.b16 %v595
    %v632 = vunpack.c.l.b16 %v596
    %v633 = vunpack.c.l.b16 %v597
    %v634 = vunpack.c.l.b16 %v598
    %v635 = vunpack.c.l.b16 %v599
    %v636 = vunpack.c.l.b16 %v600
    %v637 = vunpack.c.l.b16 %v601
    %v638 = vunpack.c.l.b16 %v602
    %v639 = vunpack.c.l.b16 %v603
    %v640 = vunpack.c.l.b16 %v604
    %v641 = vunpack.c.l.b16 %v605
    %v642 = vpack.c.b16 %v627, %v626
    %v643 = vpack.c.b16 %v629, %v628
    %v644 = vpack.c.b16 %v631, %v630
    %v645 = vpack.c.b16 %v633, %v632
    %v646 = vpack.c.b16 %v635, %v634
    %v647 = vpack.c.b16 %v637, %v636
    %v648 = vpack.c.b16 %v639, %v638
    %v649 = vpack.c.b16 %v641, %v640
    %658 = vmatprep.subr.bf16.mxu0 0
    %659 = vmatpush1.bf16.msra.mxu0 %v642
    %660 = vmatprep.subr.bf16.mxu0 0
    %661 = vmatpush1.bf16.msra.mxu0 %v643
    %662 = vmatprep.subr.bf16.mxu0 0
    %663 = vmatpush1.bf16.msra.mxu0 %v644
    %664 = vmatprep.subr.bf16.mxu0 0
    %665 = vmatpush1.bf16.msra.mxu0 %v645
    %666 = vmatprep.subr.bf16.mxu0 0
    %667 = vmatpush1.bf16.msra.mxu0 %v646
    %668 = vmatprep.subr.bf16.mxu0 0
    %669 = vmatpush1.bf16.msra.mxu0 %v647
    %670 = vmatprep.subr.bf16.mxu0 0
    %671 = vmatpush1.bf16.msra.mxu0 %v648
    %672 = vmatprep.subr.bf16.mxu0 0
    %673 = vmatpush1.bf16.msra.mxu0 %v649
    %674 = vmatprep.subr.bf16.mxu0 0
    %675 = vmatpush1.bf16.msra.mxu0 0
    %676 = vmatprep.subr.bf16.mxu0 0
    %677 = vmatpush1.bf16.msra.mxu0 0
    %678 = vmatprep.subr.bf16.mxu0 0
    %679 = vmatpush1.bf16.msra.mxu0 0
    %680 = vmatprep.subr.bf16.mxu0 0
    %681 = vmatpush1.bf16.msra.mxu0 0
    %682 = vmatprep.subr.bf16.mxu0 0
    %683 = vmatpush1.bf16.msra.mxu0 0
    %684 = vmatprep.subr.bf16.mxu0 0
    %685 = vmatpush1.bf16.msra.mxu0 0
    %686 = vmatprep.subr.bf16.mxu0 0
    %687 = vmatpush1.bf16.msra.mxu0 0
    %688 = vmatprep.subr.bf16.mxu0 0
    %689 = vmatpush1.bf16.msra.mxu0 0
    %690 = vmatprep.mubr.bf16.mxu0 0
    %691 = vmatmul.mubr.bf16.gmra.mrb[0].mxu0 %v216
    %v692 = vpop.f32.mrb[0].mxu0
    %v693 = vadd.f32 0.0, %v692
    %v694 = vpop.f32.mrb[0].mxu0
    %v695 = vpop.f32.mrb[0].mxu0
    %v696 = vadd.f32 0.0, %v695
    %v697 = vpop.f32.mrb[0].mxu0
    %698 = vmatprep.mubr.bf16.mxu0 0
    %699 = vmatmul.mubr.bf16.gmra.mrb[0].mxu0 %v218
    %v700 = vpop.f32.mrb[0].mxu0
    %v701 = vadd.f32 0.0, %v700
    %v702 = vpop.f32.mrb[0].mxu0
    %v703 = vpop.f32.mrb[0].mxu0
    %v704 = vadd.f32 0.0, %v703
    %v705 = vpop.f32.mrb[0].mxu0
    %706 = vmatprep.mubr.bf16.mxu0 0
    %707 = vmatmul.mubr.bf16.gmra.mrb[0].mxu0 %v220
    %v708 = vpop.f32.mrb[0].mxu0
    %v709 = vadd.f32 0.0, %v708
    %v710 = vpop.f32.mrb[0].mxu0
    %v711 = vpop.f32.mrb[0].mxu0
    %v712 = vadd.f32 0.0, %v711
    %v713 = vpop.f32.mrb[0].mxu0
    %714 = vmatprep.mubr.bf16.mxu0 0
    %715 = vmatmul.mubr.bf16.gmra.mrb[0].mxu0 %v608
    %v716 = vpop.f32.mrb[0].mxu0
    %v717 = vadd.f32 0.0, %v716
    %v718 = vpop.f32.mrb[0].mxu0
    %v719 = vpop.f32.mrb[0].mxu0
    %v720 = vadd.f32 0.0, %v719
    %v721 = vpop.f32.mrb[0].mxu0
    %722 = vdwg.mxu0
    %v723 = vadd.f32 %v581, %v693
    %v724 = vadd.f32 %v582, %v696
    %v725 = vadd.f32 %v583, %v701
    %v726 = vadd.f32 %v584, %v704
    %v727 = vadd.f32 %v585, %v709
    %v728 = vadd.f32 %v586, %v712
    %v729 = vadd.f32 %v587, %v717
    %v730 = vadd.f32 %v588, %v720
    %s731 = scalar_lea.vmem [#allocation5], 256
    %v732 = vld [vmem:[%s731] sm:$0xf]
    %v733 = vld [vmem:[%s731 + $0x4] sm:$0xf]
    %v734 = vld [vmem:[%s731 + $0x8] sm:$0xf]
    %v735 = vld [vmem:[%s731 + $0xc] sm:$0xf]
    %v736 = vld [vmem:[%s731 + $0x10] sm:$0xf]
    %v737 = vld [vmem:[%s731 + $0x14] sm:$0xf]
    %v738 = vld [vmem:[%s731 + $0x18] sm:$0xf]
    %v739 = vld [vmem:[%s731 + $0x1c] sm:$0xf]
    %v740 = vld [vmem:[%s731 + $0x20] sm:$0xf]
    %v741 = vld [vmem:[%s731 + $0x24] sm:$0xf]
    %v742 = vld [vmem:[%s731 + $0x28] sm:$0xf]
    %v743 = vld [vmem:[%s731 + $0x2c] sm:$0xf]
    %v744 = vld [vmem:[%s731 + $0x30] sm:$0xf]
    %v745 = vld [vmem:[%s731 + $0x34] sm:$0xf]
    %v746 = vld [vmem:[%s731 + $0x38] sm:$0xf]
    %v747 = vld [vmem:[%s731 + $0x3c] sm:$0xf]
    %v764 = vunpack.c.l.b16 %v732
    %v765 = vunpack.c.l.b16 %v733
    %v766 = vunpack.c.l.b16 %v734
    %v767 = vunpack.c.l.b16 %v735
    %v768 = vunpack.c.l.b16 %v736
    %v769 = vunpack.c.l.b16 %v737
    %v770 = vunpack.c.l.b16 %v738
    %v771 = vunpack.c.l.b16 %v739
    %v772 = vunpack.c.l.b16 %v740
    %v773 = vunpack.c.l.b16 %v741
    %v774 = vunpack.c.l.b16 %v742
    %v775 = vunpack.c.l.b16 %v743
    %v776 = vunpack.c.l.b16 %v744
    %v777 = vunpack.c.l.b16 %v745
    %v778 = vunpack.c.l.b16 %v746
    %v779 = vunpack.c.l.b16 %v747
    %v780 = vpack.c.b16 %v765, %v764
    %v781 = vpack.c.b16 %v767, %v766
    %v782 = vpack.c.b16 %v769, %v768
    %v783 = vpack.c.b16 %v771, %v770
    %v784 = vpack.c.b16 %v773, %v772
    %v785 = vpack.c.b16 %v775, %v774
    %v786 = vpack.c.b16 %v777, %v776
    %v787 = vpack.c.b16 %v779, %v778
    %796 = vmatprep.subr.bf16.mxu0 0
    %797 = vmatpush1.bf16.msra.mxu0 %v780
    %798 = vmatprep.subr.bf16.mxu0 0
    %799 = vmatpush1.bf16.msra.mxu0 %v781
    %800 = vmatprep.subr.bf16.mxu0 0
    %801 = vmatpush1.bf16.msra.mxu0 %v782
    %802 = vmatprep.subr.bf16.mxu0 0
    %803 = vmatpush1.bf16.msra.mxu0 %v783
    %804 = vmatprep.subr.bf16.mxu0 0
    %805 = vmatpush1.bf16.msra.mxu0 %v784
    %806 = vmatprep.subr.bf16.mxu0 0
    %807 = vmatpush1.bf16.msra.mxu0 %v785
    %808 = vmatprep.subr.bf16.mxu0 0
    %809 = vmatpush1.bf16.msra.mxu0 %v786
    %810 = vmatprep.subr.bf16.mxu0 0
    %811 = vmatpush1.bf16.msra.mxu0 %v787
    %812 = vmatprep.subr.bf16.mxu0 0
    %813 = vmatpush1.bf16.msra.mxu0 0
    %814 = vmatprep.subr.bf16.mxu0 0
    %815 = vmatpush1.bf16.msra.mxu0 0
    %816 = vmatprep.subr.bf16.mxu0 0
    %817 = vmatpush1.bf16.msra.mxu0 0
    %818 = vmatprep.subr.bf16.mxu0 0
    %819 = vmatpush1.bf16.msra.mxu0 0
    %820 = vmatprep.subr.bf16.mxu0 0
    %821 = vmatpush1.bf16.msra.mxu0 0
    %822 = vmatprep.subr.bf16.mxu0 0
    %823 = vmatpush1.bf16.msra.mxu0 0
    %824 = vmatprep.subr.bf16.mxu0 0
    %825 = vmatpush1.bf16.msra.mxu0 0
    %826 = vmatprep.subr.bf16.mxu0 0
    %827 = vmatpush1.bf16.msra.mxu0 0
    %828 = vmatprep.mubr.bf16.mxu0 0
    %829 = vmatmul.mubr.bf16.gmra.mrb[0].mxu0 %v159
    %v830 = vpop.f32.mrb[0].mxu0
    %v831 = vadd.f32 0.0, %v830
    %v832 = vpop.f32.mrb[0].mxu0
    %v833 = vpop.f32.mrb[0].mxu0
    %v834 = vadd.f32 0.0, %v833
    %v835 = vpop.f32.mrb[0].mxu0
    %836 = vmatprep.mubr.bf16.mxu0 0
    %837 = vmatmul.mubr.bf16.gmra.mrb[0].mxu0 %v163
    %v838 = vpop.f32.mrb[0].mxu0
    %v839 = vadd.f32 0.0, %v838
    %v840 = vpop.f32.mrb[0].mxu0
    %v841 = vpop.f32.mrb[0].mxu0
    %v842 = vadd.f32 0.0, %v841
    %v843 = vpop.f32.mrb[0].mxu0
    %844 = vmatprep.mubr.bf16.mxu0 0
    %845 = vmatmul.mubr.bf16.gmra.mrb[0].mxu0 %v167
    %v846 = vpop.f32.mrb[0].mxu0
    %v847 = vadd.f32 0.0, %v846
    %v848 = vpop.f32.mrb[0].mxu0
    %v849 = vpop.f32.mrb[0].mxu0
    %v850 = vadd.f32 0.0, %v849
    %v851 = vpop.f32.mrb[0].mxu0
    %852 = vmatprep.mubr.bf16.mxu0 0
    %853 = vmatmul.mubr.bf16.gmra.mrb[0].mxu0 %v171
    %v854 = vpop.f32.mrb[0].mxu0
    %v855 = vadd.f32 0.0, %v854
    %v856 = vpop.f32.mrb[0].mxu0
    %v857 = vpop.f32.mrb[0].mxu0
    %v858 = vadd.f32 0.0, %v857
    %v859 = vpop.f32.mrb[0].mxu0
    %860 = vdwg.mxu0
    %v861 = vadd.f32 %v723, %v831
    %v862 = vadd.f32 %v724, %v834
    %v863 = vadd.f32 %v725, %v839
    %v864 = vadd.f32 %v726, %v842
    %v865 = vadd.f32 %v727, %v847
    %v866 = vadd.f32 %v728, %v850
    %v867 = vadd.f32 %v729, %v855
    %v868 = vadd.f32 %v730, %v858
    %v869 = vld [vmem:[%s2] sm:$0x1]
    %v871 = vlaneseq
    %v872 = vshrl.u32 %v871, 7
    %v873 = vsub.s32 0, %v872
    %v874 = vrot.slane %v869, %v873
    %v876 = vadd.f32 %v861, %v874
    %v877 = vadd.f32 %v862, %v874
    %v878 = vadd.f32 %v863, %v874
    %v879 = vadd.f32 %v864, %v874
    %v880 = vadd.f32 %v865, %v874
    %v881 = vadd.f32 %v866, %v874
    %v882 = vadd.f32 %v867, %v874
    %v883 = vadd.f32 %v868, %v874
    %v884 = vmax.f32 %v876, 0.0
    %v885 = vmax.f32 %v877, 0.0
    %v886 = vmax.f32 %v878, 0.0
    %v887 = vmax.f32 %v879, 0.0
    %v888 = vmax.f32 %v880, 0.0
    %v889 = vmax.f32 %v881, 0.0
    %v890 = vmax.f32 %v882, 0.0
    %v891 = vmax.f32 %v883, 0.0
    %v892 = vmax.f32 %v884, %v885
    %v893 = vmax.f32 %v886, %v887
    %v894 = vmax.f32 %v888, %v889
    %v895 = vmax.f32 %v890, %v891
    %v896 = vmax.f32 %v892, %v893
    %v897 = vmax.f32 %v894, %v895
    %v898 = vmax.f32 %v896, %v897
    %v899 = vpack.c.bf16 %v898, %v898
    %v900 = vld [vmem:[#allocation7] sm:$0xff]
    %v901 = vld [vmem:[#allocation7 + $0x8] sm:$0xff]
    %v902 = vld [vmem:[#allocation7 + $0x10] sm:$0xff]
    %v903 = vld [vmem:[#allocation7 + $0x18] sm:$0xff]
    %v904 = vld [vmem:[#allocation7 + $0x20] sm:$0xff]
    %v905 = vld [vmem:[#allocation7 + $0x28] sm:$0xff]
    %v906 = vld [vmem:[#allocation7 + $0x30] sm:$0xff]
    %v907 = vld [vmem:[#allocation7 + $0x38] sm:$0xff]
    %v908 = vld [vmem:[#allocation7 + $0x40] sm:$0xff]
    %v909 = vld [vmem:[#allocation7 + $0x48] sm:$0xff]
    %v910 = vld [vmem:[#allocation7 + $0x50] sm:$0xff]
    %v911 = vld [vmem:[#allocation7 + $0x58] sm:$0xff]
    %v912 = vld [vmem:[#allocation7 + $0x60] sm:$0xff]
    %v913 = vld [vmem:[#allocation7 + $0x68] sm:$0xff]
    %v914 = vld [vmem:[#allocation7 + $0x70] sm:$0xff]
    %v915 = vld [vmem:[#allocation7 + $0x78] sm:$0xff]
    %v916 = vld [vmem:[%s4] sm:$0x3]
    %v918 = vlaneseq
    %v919 = vshrl.u32 %v918, 7
    %v920 = vsub.s32 0, %v919
    %v921 = vrot.slane %v916, %v920
    %v922 = vlaneseq
    %v923 = vshrl.u32 %v922, 7
    %v924 = vsub.s32 1, %v923
    %v925 = vrot.slane %v916, %v924
    %v944 = vunpack.c.l.b16 %v900
    %v945 = vunpack.c.h.b16 %v900
    %v946 = vunpack.c.l.b16 %v901
    %v947 = vunpack.c.h.b16 %v901
    %v948 = vunpack.c.l.b16 %v902
    %v949 = vunpack.c.h.b16 %v902
    %v950 = vunpack.c.l.b16 %v903
    %v951 = vunpack.c.h.b16 %v903
    %v952 = vunpack.c.l.b16 %v904
    %v953 = vunpack.c.h.b16 %v904
    %v954 = vunpack.c.l.b16 %v905
    %v955 = vunpack.c.h.b16 %v905
    %v956 = vunpack.c.l.b16 %v906
    %v957 = vunpack.c.h.b16 %v906
    %v958 = vunpack.c.l.b16 %v907
    %v959 = vunpack.c.h.b16 %v907
    %v960 = vunpack.c.l.b16 %v908
    %v961 = vunpack.c.h.b16 %v908
    %v962 = vunpack.c.l.b16 %v909
    %v963 = vunpack.c.h.b16 %v909
    %v964 = vunpack.c.l.b16 %v910
    %v965 = vunpack.c.h.b16 %v910
    %v966 = vunpack.c.l.b16 %v911
    %v967 = vunpack.c.h.b16 %v911
    %v968 = vunpack.c.l.b16 %v912
    %v969 = vunpack.c.h.b16 %v912
    %v970 = vunpack.c.l.b16 %v913
    %v971 = vunpack.c.h.b16 %v913
    %v972 = vunpack.c.l.b16 %v914
    %v973 = vunpack.c.h.b16 %v914
    %v974 = vunpack.c.l.b16 %v915
    %v975 = vunpack.c.h.b16 %v915
    %v976 = vpack.c.b16 %v946, %v944
    %v977 = vpack.c.b16 %v947, %v945
    %v978 = vpack.c.b16 %v950, %v948
    %v979 = vpack.c.b16 %v951, %v949
    %v980 = vpack.c.b16 %v954, %v952
    %v981 = vpack.c.b16 %v955, %v953
    %v982 = vpack.c.b16 %v958, %v956
    %v983 = vpack.c.b16 %v959, %v957
    %v984 = vpack.c.b16 %v962, %v960
    %v985 = vpack.c.b16 %v963, %v961
    %v986 = vpack.c.b16 %v966, %v964
    %v987 = vpack.c.b16 %v967, %v965
    %v988 = vpack.c.b16 %v970, %v968
    %v989 = vpack.c.b16 %v971, %v969
    %v990 = vpack.c.b16 %v974, %v972
    %v991 = vpack.c.b16 %v975, %v973
    %1008 = vmatprep.subr.bf16.mxu0 %v977
    %1009 = vmatpush1.bf16.msra.mxu0 %v976
    %1010 = vmatprep.subr.bf16.mxu0 %v979
    %1011 = vmatpush1.bf16.msra.mxu0 %v978
    %1012 = vmatprep.subr.bf16.mxu0 %v981
    %1013 = vmatpush1.bf16.msra.mxu0 %v980
    %1014 = vmatprep.subr.bf16.mxu0 %v983
    %1015 = vmatpush1.bf16.msra.mxu0 %v982
    %1016 = vmatprep.subr.bf16.mxu0 %v985
    %1017 = vmatpush1.bf16.msra.mxu0 %v984
    %1018 = vmatprep.subr.bf16.mxu0 %v987
    %1019 = vmatpush1.bf16.msra.mxu0 %v986
    %1020 = vmatprep.subr.bf16.mxu0 %v989
    %1021 = vmatpush1.bf16.msra.mxu0 %v988
    %1022 = vmatprep.subr.bf16.mxu0 %v991
    %1023 = vmatpush1.bf16.msra.mxu0 %v990
    %1024 = vmatprep.subr.bf16.mxu0 0
    %1025 = vmatpush1.bf16.msra.mxu0 0
    %1026 = vmatprep.subr.bf16.mxu0 0
    %1027 = vmatpush1.bf16.msra.mxu0 0
    %1028 = vmatprep.subr.bf16.mxu0 0
    %1029 = vmatpush1.bf16.msra.mxu0 0
    %1030 = vmatprep.subr.bf16.mxu0 0
    %1031 = vmatpush1.bf16.msra.mxu0 0
    %1032 = vmatprep.subr.bf16.mxu0 0
    %1033 = vmatpush1.bf16.msra.mxu0 0
    %1034 = vmatprep.subr.bf16.mxu0 0
    %1035 = vmatpush1.bf16.msra.mxu0 0
    %1036 = vmatprep.subr.bf16.mxu0 0
    %1037 = vmatpush1.bf16.msra.mxu0 0
    %1038 = vmatprep.subr.bf16.mxu0 0
    %1039 = vmatpush1.bf16.msra.mxu0 0
    %1040 = vmatprep.mubr.bf16.mxu0 0
    %1041 = vmatmul.mubr.bf16.gmra.mrb[0].mxu0 %v899
    %v1042 = vpop.f32.mrb[0].mxu0
    %v1043 = vadd.f32 %v921, %v1042
    %v1044 = vpop.f32.mrb[0].mxu0
    %v1045 = vadd.f32 %v925, %v1044
    %v1046 = vpop.f32.mrb[0].mxu0
    %v1047 = vpop.f32.mrb[0].mxu0
    %1048 = vdwg.mxu0
    %v1049 = vmax.f32 %v1043, 0.0
    %v1050 = vsub.f32 0.0, %v1045
    %v1051 = vmul.f32 %v1050, 1.442695
    %v1052 = vpow.pop %v1051
    %v1053 = vadd.f32 %v1052, 1.0
    %v1054 = vrcp.pop %v1053
    %v1055 = vmul.f32 1.0, %v1054
    %v1056 = vmul.f32 %v1055, %v1049
    %v1057 = vsub.f32 1.0, %v1055
    %v1058 = vmul.f32 %v1057, %v898
    %v1059 = vadd.f32 %v1056, %v1058
    %1060 = vst [vmem:[#allocation8] sm:$0xff] %v1059
    // Predicated region
    $region34: #{tpu_custom_call.1} parent=1 // pred_check
      _
    $region35: #{tpu_custom_call.1} parent=1 // pred_check_branch
      %1062 = sbr.rel (0) target = $region37
    $region36: #{tpu_custom_call.1} parent=1 // pred_region
      %s1064 = ssub.s32 128, 128
      %1065 = vsyncadd [#allocation4], %s1064
      %s1067 = sshll.u32 [#allocation8], 4
      %s1068 = int_to_ptr.vmem [resolvable:$true] %s1067
      %1070 = dma.vmem_to_hbm [thread:$0]  %s1068, 128, %s5, [#allocation4]
    $region37: #{tpu_custom_call.1} parent=1 // pred_fallthru
      _
    // Predicated region
    $region38: #{tpu_custom_call.1} parent=1 // pred_check
      _
    $region39: #{tpu_custom_call.1} parent=1 // pred_check_branch
      %1072 = sbr.rel (0) target = $region41
    $region40: #{tpu_custom_call.1} parent=1 // pred_region
      %1073 = dma.done [#allocation4], 128
    $region41: #{tpu_custom_call.1} parent=1 // pred_fallthru
      _
    %1074 = vsyncpa [#allocation3], 1
    %1075 = vsyncpa [#allocation6], 1
    %1076 = vsyncpa [#allocation4], 1

</llo_original>
